<compile_context>
chip_gen: v7x
topology: tpu7x:2x2x1
jax: 0.10.0
libtpu: 0.0.40
codegen_flags: <defaults>
</compile_context>

<pallas_src>
import math

import jax
import jax.numpy as jnp
from jax.experimental import pallas as pl
from jax.experimental.pallas import tpu as pltpu

IN_SIZE = 2
DISTS = 2 << 4                      # 32
LOG_2PI = math.log(2.0 * math.pi)


# ------------------------------ Pallas kernel --------------------------------
def _density_kernel(eps_ref, wmix_ref, cmix_ref, comp_ref, val_ref, pdf_ref):
    eps = eps_ref[...]                                            # (TM, 2*DISTS) f32

    # mixture sample: val = [eps0 | eps1] @ W_mix + sum_i k_i * centers_i  -> (TM, 2)
    val = (jnp.dot(eps, wmix_ref[...], preferred_element_type=jnp.float32)
           + cmix_ref[...])
    val_ref[...] = val.astype(val_ref.dtype)

    # mixture pdf at val; components live on the lane axis (DISTS lanes).
    comp = comp_ref[...]                                          # (6, DISTS)
    c0, c1 = comp[0:1, :], comp[1:2, :]
    inv_a, off, inv_b, coef = comp[2:3, :], comp[3:4, :], comp[4:5, :], comp[5:6, :]

    v0 = val[:, 0:1]                                              # (TM, 1)
    v1 = val[:, 1:2]
    z0 = (v0 - c0) * inv_a                                        # (TM, DISTS)
    z1 = ((v1 - c1) - off * z0) * inv_b
    p = coef * jnp.exp(-0.5 * (z0 * z0 + z1 * z1))                # coef = k/(2*pi*alpha*beta)
    pdf_ref[...] = jnp.sum(p, axis=-1, keepdims=True).astype(pdf_ref.dtype)


# ------------------------------ wrapper / glue --------------------------------
def _round_up(x, m):
    return ((x + m - 1) // m) * m


def _prep_params(params):
    """O(DISTS) parameter prep (softmax / exp / packing) kept in plain JAX."""
    centers = params["centers"].astype(jnp.float32)               # (DISTS, 2)
    v = params["vars"].astype(jnp.float32)                        # (DISTS, 3): [a, d0, d1]
    weights = params["weights"].astype(jnp.float32)               # (DISTS,)

    a, d0, d1 = v[:, 0], v[:, 1], v[:, 2]
    alpha, beta = jnp.exp(d0), jnp.exp(d1)
    k = jax.nn.softmax(weights)

    # val = [eps0 | eps1] @ W_mix + c_mix
    w_top = jnp.stack([k * alpha, k * a], axis=-1)                # eps0 contribution (DISTS, 2)
    w_bot = jnp.stack([jnp.zeros_like(k), k * beta], axis=-1)     # eps1 contribution (DISTS, 2)
    w_mix = jnp.concatenate([w_top, w_bot], axis=0)               # (2*DISTS, 2)
    c_mix = jnp.sum(k[:, None] * centers, axis=0, keepdims=True)  # (1, 2)

    coef = k * jnp.exp(-LOG_2PI - d0 - d1)                        # k_i / (2*pi*alpha_i*beta_i)
    comp = jnp.stack([centers[:, 0], centers[:, 1],
                      1.0 / alpha, a, 1.0 / beta, coef], axis=0)  # (6, DISTS)
    return w_mix, c_mix, comp


def _forward_from_noise(params, eps, *, max_tile_m=1024):
    """eps: sample_shape + (DISTS, IN_SIZE) standard-normal noise."""
    sample_shape = eps.shape[:-2]
    # TODO(synk): general torch log_prob broadcasting for sample_shape[-1] != 1 is not
    # implemented; the module's usage keeps a trailing sample dim of 1 (mixture pdf).
    assert sample_shape[-1] == 1, "expects a trailing sample dim of 1"

    n = 1
    for s in sample_shape:
        n *= s

    eps_flat = eps.reshape(n, DISTS, IN_SIZE).astype(jnp.float32)
    eps_cat = jnp.concatenate([eps_flat[:, :, 0], eps_flat[:, :, 1]], axis=-1)  # (n, 2*DISTS)

    w_mix, c_mix, comp = _prep_params(params)

    tile_m = min(max_tile_m, _round_up(n, 128))
    n_pad = _round_up(n, tile_m)
    if n_pad != n:
        eps_cat = jnp.pad(eps_cat, ((0, n_pad - n), (0, 0)))

    val_pad, pdf_pad = pl.pallas_call(
        _density_kernel,
        out_shape=(jax.ShapeDtypeStruct((n_pad, IN_SIZE), jnp.float32),
                   jax.ShapeDtypeStruct((n_pad, 1), jnp.float32)),
        grid=(n_pad // tile_m,),
        in_specs=[
            pl.BlockSpec((tile_m, 2 * DISTS), lambda i: (i, 0)),   # streamed noise
            pl.BlockSpec((2 * DISTS, IN_SIZE), lambda i: (0, 0)),  # VMEM-resident params
            pl.BlockSpec((1, IN_SIZE), lambda i: (0, 0)),
            pl.BlockSpec((6, DISTS), lambda i: (0, 0)),
        ],
        out_specs=(pl.BlockSpec((tile_m, IN_SIZE), lambda i: (i, 0)),
                   pl.BlockSpec((tile_m, 1), lambda i: (i, 0))),
        compiler_params=pltpu.CompilerParams(
            dimension_semantics=("parallel",)),
    )(eps_cat, w_mix, c_mix, comp)

    val = val_pad[:n].reshape(sample_shape + (IN_SIZE,))
    pdf = pdf_pad[:n, 0].reshape(sample_shape[:-1])
    return val, pdf


def density_estimator_forward(params, shape, key):
    """Pallas-backed equivalent of DensityEstimator.forward(shape)."""
    eps = jax.random.normal(key, tuple(shape) + (DISTS, IN_SIZE), jnp.float32)
    return _forward_from_noise(params, eps)


# ------------------------- reference (pure JAX) -------------------------------
def reference_forward(params, eps):
    centers = params["centers"]
    v = params["vars"]
    weights = params["weights"]
    a, d0, d1 = v[:, 0], v[:, 1], v[:, 2]
    alpha, beta = jnp.exp(d0), jnp.exp(d1)

    L = jnp.zeros((DISTS, IN_SIZE, IN_SIZE), jnp.float32)
    L = L.at[:, 0, 0].set(alpha).at[:, 1, 0].set(a).at[:, 1, 1].set(beta)

    out = centers + jnp.einsum("dij,...dj->...di", L, eps)        # sample_shape + (D, 2)
    k = jax.nn.softmax(weights)
    val = jnp.einsum("...dc,d->...c", out, k)                     # sample_shape + (2,)

    diff = val[..., None, :] - centers                            # sample_shape + (D, 2)
    z0 = diff[..., 0] / alpha
    z1 = (diff[..., 1] - a * z0) / beta
    logp = -LOG_2PI - d0 - d1 - 0.5 * (z0 * z0 + z1 * z1)
    pdf = jnp.sum(k * jnp.exp(logp), axis=-1)                     # sample_shape

    sample_shape = eps.shape[:-2]
    return val, pdf.reshape(sample_shape[:-1])


# ----------------------------------- main --------------------------------------
if __name__ == "__main__":
    key = jax.random.PRNGKey(0)
    k_c, k_v, k_w, k_eps = jax.random.split(key, 4)

    # nn.Parameters (zeros in the PyTorch __init__; small random values here so
    # the math is non-trivial while keeping the module's pdf<=1 invariant).
    params = {
        "centers": 0.5 * jax.random.normal(k_c, (DISTS, IN_SIZE), jnp.float32),
        "vars": jax.random.uniform(k_v, (DISTS, IN_SIZE * (IN_SIZE + 1) // 2),
                                   jnp.float32, minval=-0.3, maxval=0.3),
        "weights": jax.random.normal(k_w, (DISTS,), jnp.float32),
    }

    shape = (2, 4, 8, 1)            # sample_shape argument of forward()
    val, pdf = density_estimator_forward(params, shape, k_eps)
    val, pdf = jax.block_until_ready((val, pdf))

    # pure-JAX reference using the exact same noise draw
    eps = jax.random.normal(k_eps, shape + (DISTS, IN_SIZE), jnp.float32)
    val_ref, pdf_ref = reference_forward(params, eps)

    assert val.shape == shape + (IN_SIZE,), val.shape
    assert pdf.shape == shape[:-1], pdf.shape
    assert jnp.allclose(val, val_ref, atol=1e-5, rtol=1e-5), \
        float(jnp.max(jnp.abs(val - val_ref)))
    assert jnp.allclose(pdf, pdf_ref, atol=1e-5, rtol=1e-5), \
        float(jnp.max(jnp.abs(pdf - pdf_ref)))
    # the module's own runtime checks (done host-side)
    assert bool((pdf >= 0.0).all()) and bool((pdf <= 1.0).all())

    print("KERNEL_OK")
</pallas_src>

<mosaic_0001>
module attributes {stable_mosaic.version = 11 : i64} {
  func.func @_density_kernel(%arg0: i32, %arg1: memref<128x64xf32, #tpu.memory_space<vmem>>, %arg2: memref<64x2xf32, #tpu.memory_space<vmem>>, %arg3: memref<1x2xf32, #tpu.memory_space<vmem>>, %arg4: memref<6x32xf32, #tpu.memory_space<vmem>>, %arg5: memref<128x2xf32, #tpu.memory_space<vmem>>, %arg6: memref<128x1xf32, #tpu.memory_space<vmem>>) attributes {dimension_semantics = [#tpu.dimension_semantics<parallel>], iteration_bounds = array<i64: 1>, scalar_prefetch = 0 : i64, scratch_operands = 0 : i64, tpu.core_type = #tpu.core_type<tc>, window_params = [{transform_indices = @transform_0, window_bounds = array<i64: 128, 64>}, {pipeline_mode = #tpu.pipeline_mode<synchronous>, transform_indices = @transform_1, window_bounds = array<i64: 64, 2>}, {pipeline_mode = #tpu.pipeline_mode<synchronous>, transform_indices = @transform_2, window_bounds = array<i64: 1, 2>}, {pipeline_mode = #tpu.pipeline_mode<synchronous>, transform_indices = @transform_3, window_bounds = array<i64: 6, 32>}, {transform_indices = @transform_4, window_bounds = array<i64: 128, 2>}, {transform_indices = @transform_5, window_bounds = array<i64: 128, 1>}]} {
    %c0 = arith.constant 0 : index
    %c0_0 = arith.constant 0 : index
    %0 = vector.load %arg1[%c0, %c0_0] : memref<128x64xf32, #tpu.memory_space<vmem>>, vector<128x64xf32>
    %c0_1 = arith.constant 0 : index
    %c0_2 = arith.constant 0 : index
    %1 = vector.load %arg2[%c0_1, %c0_2] : memref<64x2xf32, #tpu.memory_space<vmem>>, vector<64x2xf32>
    %cst = arith.constant dense<0.000000e+00> : vector<128x2xf32>
    %2 = tpu.matmul %0, %1, %cst {dimension_numbers = #tpu.dot_dimension_numbers<[1], [0], [0], [1], [0, 0, 1, 1], [], []>} : vector<128x64xf32>, vector<64x2xf32>, vector<128x2xf32> -> vector<128x2xf32>
    %c0_3 = arith.constant 0 : index
    %c0_4 = arith.constant 0 : index
    %3 = vector.load %arg3[%c0_3, %c0_4] : memref<1x2xf32, #tpu.memory_space<vmem>>, vector<1x2xf32>
    %4 = vector.broadcast %3 : vector<1x2xf32> to vector<128x2xf32>
    %5 = arith.addf %2, %4 : vector<128x2xf32>
    %c0_5 = arith.constant 0 : index
    %c0_6 = arith.constant 0 : index
    %6 = vector.load %arg5[%c0_5, %c0_6] : memref<128x2xf32, #tpu.memory_space<vmem>>, vector<128x2xf32>
    tpu.vector_store %arg5[%c0_5, %c0_6], %5 {strides = array<i32>} : memref<128x2xf32, #tpu.memory_space<vmem>>, vector<128x2xf32>,
    %c0_7 = arith.constant 0 : index
    %c0_8 = arith.constant 0 : index
    %7 = vector.load %arg4[%c0_7, %c0_8] : memref<6x32xf32, #tpu.memory_space<vmem>>, vector<6x32xf32>
    %8 = vector.extract_strided_slice %7 {offsets = [0, 0], sizes = [1, 32], strides = [1, 1]} : vector<6x32xf32> to vector<1x32xf32>
    %9 = vector.extract_strided_slice %7 {offsets = [1, 0], sizes = [1, 32], strides = [1, 1]} : vector<6x32xf32> to vector<1x32xf32>
    %10 = vector.extract_strided_slice %7 {offsets = [2, 0], sizes = [1, 32], strides = [1, 1]} : vector<6x32xf32> to vector<1x32xf32>
    %11 = vector.extract_strided_slice %7 {offsets = [3, 0], sizes = [1, 32], strides = [1, 1]} : vector<6x32xf32> to vector<1x32xf32>
    %12 = vector.extract_strided_slice %7 {offsets = [4, 0], sizes = [1, 32], strides = [1, 1]} : vector<6x32xf32> to vector<1x32xf32>
    %13 = vector.extract_strided_slice %7 {offsets = [5, 0], sizes = [1, 32], strides = [1, 1]} : vector<6x32xf32> to vector<1x32xf32>
    %14 = vector.extract_strided_slice %5 {offsets = [0, 0], sizes = [128, 1], strides = [1, 1]} : vector<128x2xf32> to vector<128x1xf32>
    %15 = vector.extract_strided_slice %5 {offsets = [0, 1], sizes = [128, 1], strides = [1, 1]} : vector<128x2xf32> to vector<128x1xf32>
    %16 = vector.broadcast %14 : vector<128x1xf32> to vector<128x32xf32>
    %17 = vector.broadcast %8 : vector<1x32xf32> to vector<128x32xf32>
    %18 = arith.subf %16, %17 : vector<128x32xf32>
    %19 = vector.broadcast %10 : vector<1x32xf32> to vector<128x32xf32>
    %20 = arith.mulf %18, %19 : vector<128x32xf32>
    %21 = vector.broadcast %15 : vector<128x1xf32> to vector<128x32xf32>
    %22 = vector.broadcast %9 : vector<1x32xf32> to vector<128x32xf32>
    %23 = arith.subf %21, %22 : vector<128x32xf32>
    %24 = vector.broadcast %11 : vector<1x32xf32> to vector<128x32xf32>
    %25 = arith.mulf %24, %20 : vector<128x32xf32>
    %26 = arith.subf %23, %25 : vector<128x32xf32>
    %27 = vector.broadcast %12 : vector<1x32xf32> to vector<128x32xf32>
    %28 = arith.mulf %26, %27 : vector<128x32xf32>
    %29 = arith.mulf %20, %20 : vector<128x32xf32>
    %30 = arith.mulf %28, %28 : vector<128x32xf32>
    %31 = arith.addf %29, %30 : vector<128x32xf32>
    %cst_9 = arith.constant -5.000000e-01 : f32
    %32 = vector.broadcast %cst_9 : f32 to vector<128x32xf32>
    %33 = arith.mulf %32, %31 : vector<128x32xf32>
    %34 = math.exp %33 : vector<128x32xf32>
    %35 = vector.broadcast %13 : vector<1x32xf32> to vector<128x32xf32>
    %36 = arith.mulf %35, %34 : vector<128x32xf32>
    %cst_10 = arith.constant dense<0.000000e+00> : vector<128xf32>
    %37 = vector.multi_reduction <add>, %36, %cst_10 [1] : vector<128x32xf32> to vector<128xf32>
    %38 = vector.shape_cast %37 : vector<128xf32> to vector<128x1xf32>
    %c0_11 = arith.constant 0 : index
    %c0_12 = arith.constant 0 : index
    %39 = vector.load %arg6[%c0_11, %c0_12] : memref<128x1xf32, #tpu.memory_space<vmem>>, vector<128x1xf32>
    tpu.vector_store %arg6[%c0_11, %c0_12], %38 {strides = array<i32>} : memref<128x1xf32, #tpu.memory_space<vmem>>, vector<128x1xf32>,
    return
  }
  func.func @transform_0(%arg0: i32) -> (i32, i32) {
    %c0_i32 = arith.constant 0 : i32
    %c0_i32_0 = arith.constant 0 : i32
    return %arg0, %c0_i32 : i32, i32
  }
  func.func @transform_1(%arg0: i32) -> (i32, i32) {
    %c0_i32 = arith.constant 0 : i32
    %c0_i32_0 = arith.constant 0 : i32
    %c0_i32_1 = arith.constant 0 : i32
    return %c0_i32, %c0_i32_0 : i32, i32
  }
  func.func @transform_2(%arg0: i32) -> (i32, i32) {
    %c0_i32 = arith.constant 0 : i32
    %c0_i32_0 = arith.constant 0 : i32
    %c0_i32_1 = arith.constant 0 : i32
    return %c0_i32, %c0_i32_0 : i32, i32
  }
  func.func @transform_3(%arg0: i32) -> (i32, i32) {
    %c0_i32 = arith.constant 0 : i32
    %c0_i32_0 = arith.constant 0 : i32
    %c0_i32_1 = arith.constant 0 : i32
    return %c0_i32, %c0_i32_0 : i32, i32
  }
  func.func @transform_4(%arg0: i32) -> (i32, i32) {
    %c0_i32 = arith.constant 0 : i32
    %c0_i32_0 = arith.constant 0 : i32
    return %arg0, %c0_i32 : i32, i32
  }
  func.func @transform_5(%arg0: i32) -> (i32, i32) {
    %c0_i32 = arith.constant 0 : i32
    %c0_i32_0 = arith.constant 0 : i32
    return %arg0, %c0_i32 : i32, i32
  }
}

</mosaic_0001>

<llo_original>
// kernel: tpu_custom_call.1
$region0: #{tpu_custom_call.1}
  #allocation0 [shape = 'u32[]', space=smem, size = 0x4, offset = 0x4, fixed_abs, tag = 'smem constant byte address 0x4 - core index']
  #allocation1 [shape = 'u32[144,128]{1,0:T(1,128)}', space=vmem, size = 0x12000, scoped, tag = 'internal scratch']
  %s0 = inlined_call_operand.vmem [shape: f32[128,64], index: 0, kind: input, shape index: {}]
  %s1 = inlined_call_operand.vmem [shape: f32[64,2], index: 1, kind: input, shape index: {}]
  %s2 = inlined_call_operand.vmem [shape: f32[1,2], index: 2, kind: input, shape index: {}]
  %s3 = inlined_call_operand.vmem [shape: f32[6,32], index: 3, kind: input, shape index: {}]
  %s4 = inlined_call_operand.vmem [shape: f32[128,2], index: 4, kind: output, shape index: {0}]
  %s5 = inlined_call_operand.vmem [shape: f32[128,1], index: 5, kind: output, shape index: {1}]
  %6 = xla_tuple %s4, %s5
  %s7 = sld [smem:[#allocation0]]
  $region34: #{tpu_custom_call.1} parent=0
    _
  %s9 = ssub.s32 1, %s7
  %s10 = scalar_select 0, %s9, %s7
  // Predicated region
  $region2: #{tpu_custom_call.1} parent=0 // pred_check
    _
  $region3: #{tpu_custom_call.1} parent=0 // pred_check_branch
    %12 = sbr.rel (0) target = $region5
  $region4: #{tpu_custom_call.1} parent=0 // pred_region
    _
  $region5: #{tpu_custom_call.1} parent=0 // pred_fallthru
    _
  // Predicated region
  $region6: #{tpu_custom_call.1} parent=0 // pred_check
    _
  $region7: #{tpu_custom_call.1} parent=0 // pred_check_branch
    %14 = sbr.rel (0) target = $region9
  $region8: #{tpu_custom_call.1} parent=0 // pred_region
    _
  $region9: #{tpu_custom_call.1} parent=0 // pred_fallthru
    _
  // Predicated region
  $region10: #{tpu_custom_call.1} parent=0 // pred_check
    _
  $region11: #{tpu_custom_call.1} parent=0 // pred_check_branch
    %16 = sbr.rel (0) target = $region13
  $region12: #{tpu_custom_call.1} parent=0 // pred_region
    _
  $region13: #{tpu_custom_call.1} parent=0 // pred_fallthru
    _
  // Predicated region
  $region14: #{tpu_custom_call.1} parent=0 // pred_check
    _
  $region15: #{tpu_custom_call.1} parent=0 // pred_check_branch
    %18 = sbr.rel (0) target = $region17
  $region16: #{tpu_custom_call.1} parent=0 // pred_region
    _
  $region17: #{tpu_custom_call.1} parent=0 // pred_fallthru
    _
  %v19 = vld [vmem:[%s0] sm:$0xff]
  %v20 = vld [vmem:[%s0 + $0x8] sm:$0xff]
  %v21 = vld [vmem:[%s0 + $0x10] sm:$0xff]
  %v22 = vld [vmem:[%s0 + $0x18] sm:$0xff]
  %v23 = vld [vmem:[%s0 + $0x20] sm:$0xff]
  %v24 = vld [vmem:[%s0 + $0x28] sm:$0xff]
  %v25 = vld [vmem:[%s0 + $0x30] sm:$0xff]
  %v26 = vld [vmem:[%s0 + $0x38] sm:$0xff]
  %v27 = vld [vmem:[%s0 + $0x40] sm:$0xff]
  %v28 = vld [vmem:[%s0 + $0x48] sm:$0xff]
  %v29 = vld [vmem:[%s0 + $0x50] sm:$0xff]
  %v30 = vld [vmem:[%s0 + $0x58] sm:$0xff]
  %v31 = vld [vmem:[%s0 + $0x60] sm:$0xff]
  %v32 = vld [vmem:[%s0 + $0x68] sm:$0xff]
  %v33 = vld [vmem:[%s0 + $0x70] sm:$0xff]
  %v34 = vld [vmem:[%s0 + $0x78] sm:$0xff]
  %v35 = vld [vmem:[%s1] sm:$0xff]
  %v36 = vld [vmem:[%s1 + $0x8] sm:$0xff]
  %v37 = vld [vmem:[%s1 + $0x10] sm:$0xff]
  %v38 = vld [vmem:[%s1 + $0x18] sm:$0xff]
  %v39 = vld [vmem:[%s1 + $0x20] sm:$0xff]
  %v40 = vld [vmem:[%s1 + $0x28] sm:$0xff]
  %v41 = vld [vmem:[%s1 + $0x30] sm:$0xff]
  %v42 = vld [vmem:[%s1 + $0x38] sm:$0xff]
  %v43 = vld [vmem:[%s2] sm:$0x1]
  %v45 = vlaneseq
  %v46 = vshrl.u32 %v45, 7
  %v47 = vsub.s32 0, %v46
  %v48 = vrot.slane %v43, %v47
  %vm50 = vcmask 523264
  %v52 = vsel %vm50, %v19, 0
  %v55 = vsel %vm50, %v20, 0
  %v58 = vsel %vm50, %v21, 0
  %v61 = vsel %vm50, %v22, 0
  %v64 = vsel %vm50, %v23, 0
  %v67 = vsel %vm50, %v24, 0
  %v70 = vsel %vm50, %v25, 0
  %v73 = vsel %vm50, %v26, 0
  %v76 = vsel %vm50, %v27, 0
  %v79 = vsel %vm50, %v28, 0
  %v82 = vsel %vm50, %v29, 0
  %v85 = vsel %vm50, %v30, 0
  %v88 = vsel %vm50, %v31, 0
  %v91 = vsel %vm50, %v32, 0
  %v94 = vsel %vm50, %v33, 0
  %v97 = vsel %vm50, %v34, 0
  %99 = vmatprep.subr.mxu0 0.0
  %100 = vmatpush1.msra.mxu0 %v35
  %101 = vmatprep.subr.mxu0 0.0
  %102 = vmatpush1.msra.mxu0 %v36
  %103 = vmatprep.subr.mxu0 0.0
  %104 = vmatpush1.msra.mxu0 %v37
  %105 = vmatprep.subr.mxu0 0.0
  %106 = vmatpush1.msra.mxu0 %v38
  %107 = vmatprep.subr.mxu0 0.0
  %108 = vmatpush1.msra.mxu0 %v39
  %109 = vmatprep.subr.mxu0 0.0
  %110 = vmatpush1.msra.mxu0 %v40
  %111 = vmatprep.subr.mxu0 0.0
  %112 = vmatpush1.msra.mxu0 %v41
  %113 = vmatprep.subr.mxu0 0.0
  %114 = vmatpush1.msra.mxu0 %v42
  %115 = vmatprep.subr.mxu0 0.0
  %116 = vmatpush1.msra.mxu0 0.0
  %117 = vmatprep.subr.mxu0 0.0
  %118 = vmatpush1.msra.mxu0 0.0
  %119 = vmatprep.subr.mxu0 0.0
  %120 = vmatpush1.msra.mxu0 0.0
  %121 = vmatprep.subr.mxu0 0.0
  %122 = vmatpush1.msra.mxu0 0.0
  %123 = vmatprep.subr.mxu0 0.0
  %124 = vmatpush1.msra.mxu0 0.0
  %125 = vmatprep.subr.mxu0 0.0
  %126 = vmatpush1.msra.mxu0 0.0
  %127 = vmatprep.subr.mxu0 0.0
  %128 = vmatpush1.msra.mxu0 0.0
  %129 = vmatprep.subr.mxu0 0.0
  %130 = vmatpush1.msra.mxu0 0.0
  %131 = vmatprep.subr.mxu0 0.0
  %132 = vmatpush1.msra.mxu0 0.0
  %133 = vmatprep.subr.mxu0 0.0
  %134 = vmatpush1.msra.mxu0 0.0
  %135 = vmatprep.subr.mxu0 0.0
  %136 = vmatpush1.msra.mxu0 0.0
  %137 = vmatprep.subr.mxu0 0.0
  %138 = vmatpush1.msra.mxu0 0.0
  %139 = vmatprep.subr.mxu0 0.0
  %140 = vmatpush1.msra.mxu0 0.0
  %141 = vmatprep.subr.mxu0 0.0
  %142 = vmatpush1.msra.mxu0 0.0
  %143 = vmatprep.subr.mxu0 0.0
  %144 = vmatpush1.msra.mxu0 0.0
  %145 = vmatprep.subr.mxu0 0.0
  %146 = vmatpush1.msra.mxu0 0.0
  %147 = vmatprep.subr.mxu0 0.0
  %148 = vmatpush1.msra.mxu0 0.0
  %149 = vmatprep.subr.mxu0 0.0
  %150 = vmatpush1.msra.mxu0 0.0
  %151 = vmatprep.subr.mxu0 0.0
  %152 = vmatpush1.msra.mxu0 0.0
  %153 = vmatprep.subr.mxu0 0.0
  %154 = vmatpush1.msra.mxu0 0.0
  %155 = vmatprep.subr.mxu0 0.0
  %156 = vmatpush1.msra.mxu0 0.0
  %157 = vmatprep.subr.mxu0 0.0
  %158 = vmatpush1.msra.mxu0 0.0
  %159 = vmatprep.subr.mxu0 0.0
  %160 = vmatpush1.msra.mxu0 0.0
  %161 = vmatprep.subr.mxu0 0.0
  %162 = vmatpush1.msra.mxu0 0.0
  %163 = vmatprep.mubr.f32.mxu0 0.0
  %164 = vmatmul.mubr.f32.gmra.mrb[0].mxu0 %v52
  %v165 = vpop.f32.mrb[0].mxu0
  %v166 = vadd.f32 %v48, %v165
  %v167 = vpop.f32.mrb[0].mxu0
  %168 = vmatprep.mubr.f32.mxu0 0.0
  %169 = vmatmul.mubr.f32.gmra.mrb[0].mxu0 %v55
  %v170 = vpop.f32.mrb[0].mxu0
  %v171 = vadd.f32 %v48, %v170
  %v172 = vpop.f32.mrb[0].mxu0
  %173 = vmatprep.mubr.f32.mxu0 0.0
  %174 = vmatmul.mubr.f32.gmra.mrb[0].mxu0 %v58
  %v175 = vpop.f32.mrb[0].mxu0
  %v176 = vadd.f32 %v48, %v175
  %v177 = vpop.f32.mrb[0].mxu0
  %178 = vmatprep.mubr.f32.mxu0 0.0
  %179 = vmatmul.mubr.f32.gmra.mrb[0].mxu0 %v61
  %v180 = vpop.f32.mrb[0].mxu0
  %v181 = vadd.f32 %v48, %v180
  %v182 = vpop.f32.mrb[0].mxu0
  %183 = vmatprep.mubr.f32.mxu0 0.0
  %184 = vmatmul.mubr.f32.gmra.mrb[0].mxu0 %v64
  %v185 = vpop.f32.mrb[0].mxu0
  %v186 = vadd.f32 %v48, %v185
  %v187 = vpop.f32.mrb[0].mxu0
  %188 = vmatprep.mubr.f32.mxu0 0.0
  %189 = vmatmul.mubr.f32.gmra.mrb[0].mxu0 %v67
  %v190 = vpop.f32.mrb[0].mxu0
  %v191 = vadd.f32 %v48, %v190
  %v192 = vpop.f32.mrb[0].mxu0
  %193 = vmatprep.mubr.f32.mxu0 0.0
  %194 = vmatmul.mubr.f32.gmra.mrb[0].mxu0 %v70
  %v195 = vpop.f32.mrb[0].mxu0
  %v196 = vadd.f32 %v48, %v195
  %v197 = vpop.f32.mrb[0].mxu0
  %198 = vmatprep.mubr.f32.mxu0 0.0
  %199 = vmatmul.mubr.f32.gmra.mrb[0].mxu0 %v73
  %v200 = vpop.f32.mrb[0].mxu0
  %v201 = vadd.f32 %v48, %v200
  %v202 = vpop.f32.mrb[0].mxu0
  %203 = vmatprep.mubr.f32.mxu0 0.0
  %204 = vmatmul.mubr.f32.gmra.mrb[0].mxu0 %v76
  %v205 = vpop.f32.mrb[0].mxu0
  %v206 = vadd.f32 %v48, %v205
  %v207 = vpop.f32.mrb[0].mxu0
  %208 = vmatprep.mubr.f32.mxu0 0.0
  %209 = vmatmul.mubr.f32.gmra.mrb[0].mxu0 %v79
  %v210 = vpop.f32.mrb[0].mxu0
  %v211 = vadd.f32 %v48, %v210
  %v212 = vpop.f32.mrb[0].mxu0
  %213 = vmatprep.mubr.f32.mxu0 0.0
  %214 = vmatmul.mubr.f32.gmra.mrb[0].mxu0 %v82
  %v215 = vpop.f32.mrb[0].mxu0
  %v216 = vadd.f32 %v48, %v215
  %v217 = vpop.f32.mrb[0].mxu0
  %218 = vmatprep.mubr.f32.mxu0 0.0
  %219 = vmatmul.mubr.f32.gmra.mrb[0].mxu0 %v85
  %v220 = vpop.f32.mrb[0].mxu0
  %v221 = vadd.f32 %v48, %v220
  %v222 = vpop.f32.mrb[0].mxu0
  %223 = vmatprep.mubr.f32.mxu0 0.0
  %224 = vmatmul.mubr.f32.gmra.mrb[0].mxu0 %v88
  %v225 = vpop.f32.mrb[0].mxu0
  %v226 = vadd.f32 %v48, %v225
  %v227 = vpop.f32.mrb[0].mxu0
  %228 = vmatprep.mubr.f32.mxu0 0.0
  %229 = vmatmul.mubr.f32.gmra.mrb[0].mxu0 %v91
  %v230 = vpop.f32.mrb[0].mxu0
  %v231 = vadd.f32 %v48, %v230
  %v232 = vpop.f32.mrb[0].mxu0
  %233 = vmatprep.mubr.f32.mxu0 0.0
  %234 = vmatmul.mubr.f32.gmra.mrb[0].mxu0 %v94
  %v235 = vpop.f32.mrb[0].mxu0
  %v236 = vadd.f32 %v48, %v235
  %v237 = vpop.f32.mrb[0].mxu0
  %238 = vmatprep.mubr.f32.mxu0 0.0
  %239 = vmatmul.mubr.f32.gmra.mrb[0].mxu0 %v97
  %v240 = vpop.f32.mrb[0].mxu0
  %v241 = vadd.f32 %v48, %v240
  %v242 = vpop.f32.mrb[0].mxu0
  %243 = vdwg.mxu0
  %vm244 = vcmask 15360
  %245 = vst.msk [vmem:[%s4] sm:$0xff] %vm244, %v166
  %246 = vst.msk [vmem:[%s4 + $0x8] sm:$0xff] %vm244, %v171
  %247 = vst.msk [vmem:[%s4 + $0x10] sm:$0xff] %vm244, %v176
  %248 = vst.msk [vmem:[%s4 + $0x18] sm:$0xff] %vm244, %v181
  %249 = vst.msk [vmem:[%s4 + $0x20] sm:$0xff] %vm244, %v186
  %250 = vst.msk [vmem:[%s4 + $0x28] sm:$0xff] %vm244, %v191
  %251 = vst.msk [vmem:[%s4 + $0x30] sm:$0xff] %vm244, %v196
  %252 = vst.msk [vmem:[%s4 + $0x38] sm:$0xff] %vm244, %v201
  %253 = vst.msk [vmem:[%s4 + $0x40] sm:$0xff] %vm244, %v206
  %254 = vst.msk [vmem:[%s4 + $0x48] sm:$0xff] %vm244, %v211
  %255 = vst.msk [vmem:[%s4 + $0x50] sm:$0xff] %vm244, %v216
  %256 = vst.msk [vmem:[%s4 + $0x58] sm:$0xff] %vm244, %v221
  %257 = vst.msk [vmem:[%s4 + $0x60] sm:$0xff] %vm244, %v226
  %258 = vst.msk [vmem:[%s4 + $0x68] sm:$0xff] %vm244, %v231
  %259 = vst.msk [vmem:[%s4 + $0x70] sm:$0xff] %vm244, %v236
  %260 = vst.msk [vmem:[%s4 + $0x78] sm:$0xff] %vm244, %v241
  %v261 = vld [vmem:[%s3] sm:$0x3f]
  %263 = vset.pattern.permute.xlu0 0
  %264 = vperm.xlu0 %263, %v166
  %v265 = vpop.permute.xlu0 %264
  %268 = vset.pattern.permute.xlu0 0
  %269 = vperm.xlu0 %268, %v171
  %v270 = vpop.permute.xlu0 %269
  %273 = vset.pattern.permute.xlu0 0
  %274 = vperm.xlu0 %273, %v176
  %v275 = vpop.permute.xlu0 %274
  %278 = vset.pattern.permute.xlu0 0
  %279 = vperm.xlu0 %278, %v181
  %v280 = vpop.permute.xlu0 %279
  %283 = vset.pattern.permute.xlu0 0
  %284 = vperm.xlu0 %283, %v186
  %v285 = vpop.permute.xlu0 %284
  %288 = vset.pattern.permute.xlu0 0
  %289 = vperm.xlu0 %288, %v191
  %v290 = vpop.permute.xlu0 %289
  %293 = vset.pattern.permute.xlu0 0
  %294 = vperm.xlu0 %293, %v196
  %v295 = vpop.permute.xlu0 %294
  %298 = vset.pattern.permute.xlu0 0
  %299 = vperm.xlu0 %298, %v201
  %v300 = vpop.permute.xlu0 %299
  %303 = vset.pattern.permute.xlu0 0
  %304 = vperm.xlu0 %303, %v206
  %v305 = vpop.permute.xlu0 %304
  %308 = vset.pattern.permute.xlu0 0
  %309 = vperm.xlu0 %308, %v211
  %v310 = vpop.permute.xlu0 %309
  %313 = vset.pattern.permute.xlu0 0
  %314 = vperm.xlu0 %313, %v216
  %v315 = vpop.permute.xlu0 %314
  %318 = vset.pattern.permute.xlu0 0
  %319 = vperm.xlu0 %318, %v221
  %v320 = vpop.permute.xlu0 %319
  %323 = vset.pattern.permute.xlu0 0
  %324 = vperm.xlu0 %323, %v226
  %v325 = vpop.permute.xlu0 %324
  %328 = vset.pattern.permute.xlu0 0
  %329 = vperm.xlu0 %328, %v231
  %v330 = vpop.permute.xlu0 %329
  %333 = vset.pattern.permute.xlu0 0
  %334 = vperm.xlu0 %333, %v236
  %v335 = vpop.permute.xlu0 %334
  %338 = vset.pattern.permute.xlu0 0
  %339 = vperm.xlu0 %338, %v241
  %v340 = vpop.permute.xlu0 %339
  %v342 = vlaneseq
  %v343 = vshrl.u32 %v342, 7
  %v344 = vsub.s32 0, %v343
  %v345 = vrot.slane %v261, %v344
  %v346 = vsub.f32 %v265, %v345
  %v347 = vsub.f32 %v270, %v345
  %v348 = vsub.f32 %v275, %v345
  %v349 = vsub.f32 %v280, %v345
  %v350 = vsub.f32 %v285, %v345
  %v351 = vsub.f32 %v290, %v345
  %v352 = vsub.f32 %v295, %v345
  %v353 = vsub.f32 %v300, %v345
  %v354 = vsub.f32 %v305, %v345
  %v355 = vsub.f32 %v310, %v345
  %v356 = vsub.f32 %v315, %v345
  %v357 = vsub.f32 %v320, %v345
  %v358 = vsub.f32 %v325, %v345
  %v359 = vsub.f32 %v330, %v345
  %v360 = vsub.f32 %v335, %v345
  %v361 = vsub.f32 %v340, %v345
  %v362 = vlaneseq
  %v363 = vshrl.u32 %v362, 7
  %v364 = vsub.s32 2, %v363
  %v365 = vrot.slane %v261, %v364
  %v366 = vmul.f32 %v346, %v365
  %v367 = vmul.f32 %v347, %v365
  %v368 = vmul.f32 %v348, %v365
  %v369 = vmul.f32 %v349, %v365
  %v370 = vmul.f32 %v350, %v365
  %v371 = vmul.f32 %v351, %v365
  %v372 = vmul.f32 %v352, %v365
  %v373 = vmul.f32 %v353, %v365
  %v374 = vmul.f32 %v354, %v365
  %v375 = vmul.f32 %v355, %v365
  %v376 = vmul.f32 %v356, %v365
  %v377 = vmul.f32 %v357, %v365
  %v378 = vmul.f32 %v358, %v365
  %v379 = vmul.f32 %v359, %v365
  %v380 = vmul.f32 %v360, %v365
  %v381 = vmul.f32 %v361, %v365
  %382 = vset.pattern.permute.xlu0 1
  %383 = vperm.xlu0 %382, %v166
  %v384 = vpop.permute.xlu0 %383
  %386 = vset.pattern.permute.xlu0 1
  %387 = vperm.xlu0 %386, %v171
  %v388 = vpop.permute.xlu0 %387
  %390 = vset.pattern.permute.xlu0 1
  %391 = vperm.xlu0 %390, %v176
  %v392 = vpop.permute.xlu0 %391
  %394 = vset.pattern.permute.xlu0 1
  %395 = vperm.xlu0 %394, %v181
  %v396 = vpop.permute.xlu0 %395
  %398 = vset.pattern.permute.xlu0 1
  %399 = vperm.xlu0 %398, %v186
  %v400 = vpop.permute.xlu0 %399
  %402 = vset.pattern.permute.xlu0 1
  %403 = vperm.xlu0 %402, %v191
  %v404 = vpop.permute.xlu0 %403
  %406 = vset.pattern.permute.xlu0 1
  %407 = vperm.xlu0 %406, %v196
  %v408 = vpop.permute.xlu0 %407
  %410 = vset.pattern.permute.xlu0 1
  %411 = vperm.xlu0 %410, %v201
  %v412 = vpop.permute.xlu0 %411
  %414 = vset.pattern.permute.xlu0 1
  %415 = vperm.xlu0 %414, %v206
  %v416 = vpop.permute.xlu0 %415
  %418 = vset.pattern.permute.xlu0 1
  %419 = vperm.xlu0 %418, %v211
  %v420 = vpop.permute.xlu0 %419
  %422 = vset.pattern.permute.xlu0 1
  %423 = vperm.xlu0 %422, %v216
  %v424 = vpop.permute.xlu0 %423
  %426 = vset.pattern.permute.xlu0 1
  %427 = vperm.xlu0 %426, %v221
  %v428 = vpop.permute.xlu0 %427
  %430 = vset.pattern.permute.xlu0 1
  %431 = vperm.xlu0 %430, %v226
  %v432 = vpop.permute.xlu0 %431
  %434 = vset.pattern.permute.xlu0 1
  %435 = vperm.xlu0 %434, %v231
  %v436 = vpop.permute.xlu0 %435
  %438 = vset.pattern.permute.xlu0 1
  %439 = vperm.xlu0 %438, %v236
  %v440 = vpop.permute.xlu0 %439
  %442 = vset.pattern.permute.xlu0 1
  %443 = vperm.xlu0 %442, %v241
  %v444 = vpop.permute.xlu0 %443
  %v446 = vlaneseq
  %v447 = vshrl.u32 %v446, 7
  %v448 = vsub.s32 1, %v447
  %v449 = vrot.slane %v261, %v448
  %v450 = vsub.f32 %v384, %v449
  %v451 = vsub.f32 %v388, %v449
  %v452 = vsub.f32 %v392, %v449
  %v453 = vsub.f32 %v396, %v449
  %v454 = vsub.f32 %v400, %v449
  %v455 = vsub.f32 %v404, %v449
  %v456 = vsub.f32 %v408, %v449
  %v457 = vsub.f32 %v412, %v449
  %v458 = vsub.f32 %v416, %v449
  %v459 = vsub.f32 %v420, %v449
  %v460 = vsub.f32 %v424, %v449
  %v461 = vsub.f32 %v428, %v449
  %v462 = vsub.f32 %v432, %v449
  %v463 = vsub.f32 %v436, %v449
  %v464 = vsub.f32 %v440, %v449
  %v465 = vsub.f32 %v444, %v449
  %v466 = vlaneseq
  %v467 = vshrl.u32 %v466, 7
  %v468 = vsub.s32 3, %v467
  %v469 = vrot.slane %v261, %v468
  %v470 = vmul.f32 %v469, %v366
  %v471 = vmul.f32 %v469, %v367
  %v472 = vmul.f32 %v469, %v368
  %v473 = vmul.f32 %v469, %v369
  %v474 = vmul.f32 %v469, %v370
  %v475 = vmul.f32 %v469, %v371
  %v476 = vmul.f32 %v469, %v372
  %v477 = vmul.f32 %v469, %v373
  %v478 = vmul.f32 %v469, %v374
  %v479 = vmul.f32 %v469, %v375
  %v480 = vmul.f32 %v469, %v376
  %v481 = vmul.f32 %v469, %v377
  %v482 = vmul.f32 %v469, %v378
  %v483 = vmul.f32 %v469, %v379
  %v484 = vmul.f32 %v469, %v380
  %v485 = vmul.f32 %v469, %v381
  %v486 = vsub.f32 %v450, %v470
  %v487 = vsub.f32 %v451, %v471
  %v488 = vsub.f32 %v452, %v472
  %v489 = vsub.f32 %v453, %v473
  %v490 = vsub.f32 %v454, %v474
  %v491 = vsub.f32 %v455, %v475
  %v492 = vsub.f32 %v456, %v476
  %v493 = vsub.f32 %v457, %v477
  %v494 = vsub.f32 %v458, %v478
  %v495 = vsub.f32 %v459, %v479
  %v496 = vsub.f32 %v460, %v480
  %v497 = vsub.f32 %v461, %v481
  %v498 = vsub.f32 %v462, %v482
  %v499 = vsub.f32 %v463, %v483
  %v500 = vsub.f32 %v464, %v484
  %v501 = vsub.f32 %v465, %v485
  %v502 = vlaneseq
  %v503 = vshrl.u32 %v502, 7
  %v504 = vsub.s32 4, %v503
  %v505 = vrot.slane %v261, %v504
  %v506 = vmul.f32 %v486, %v505
  %v507 = vmul.f32 %v487, %v505
  %v508 = vmul.f32 %v488, %v505
  %v509 = vmul.f32 %v489, %v505
  %v510 = vmul.f32 %v490, %v505
  %v511 = vmul.f32 %v491, %v505
  %v512 = vmul.f32 %v492, %v505
  %v513 = vmul.f32 %v493, %v505
  %v514 = vmul.f32 %v494, %v505
  %v515 = vmul.f32 %v495, %v505
  %v516 = vmul.f32 %v496, %v505
  %v517 = vmul.f32 %v497, %v505
  %v518 = vmul.f32 %v498, %v505
  %v519 = vmul.f32 %v499, %v505
  %v520 = vmul.f32 %v500, %v505
  %v521 = vmul.f32 %v501, %v505
  %v522 = vmul.f32 %v366, %v366
  %v523 = vmul.f32 %v367, %v367
  %v524 = vmul.f32 %v368, %v368
  %v525 = vmul.f32 %v369, %v369
  %v526 = vmul.f32 %v370, %v370
  %v527 = vmul.f32 %v371, %v371
  %v528 = vmul.f32 %v372, %v372
  %v529 = vmul.f32 %v373, %v373
  %v530 = vmul.f32 %v374, %v374
  %v531 = vmul.f32 %v375, %v375
  %v532 = vmul.f32 %v376, %v376
  %v533 = vmul.f32 %v377, %v377
  %v534 = vmul.f32 %v378, %v378
  %v535 = vmul.f32 %v379, %v379
  %v536 = vmul.f32 %v380, %v380
  %v537 = vmul.f32 %v381, %v381
  %v538 = vmul.f32 %v506, %v506
  %v539 = vmul.f32 %v507, %v507
  %v540 = vmul.f32 %v508, %v508
  %v541 = vmul.f32 %v509, %v509
  %v542 = vmul.f32 %v510, %v510
  %v543 = vmul.f32 %v511, %v511
  %v544 = vmul.f32 %v512, %v512
  %v545 = vmul.f32 %v513, %v513
  %v546 = vmul.f32 %v514, %v514
  %v547 = vmul.f32 %v515, %v515
  %v548 = vmul.f32 %v516, %v516
  %v549 = vmul.f32 %v517, %v517
  %v550 = vmul.f32 %v518, %v518
  %v551 = vmul.f32 %v519, %v519
  %v552 = vmul.f32 %v520, %v520
  %v553 = vmul.f32 %v521, %v521
  %v554 = vadd.f32 %v522, %v538
  %v555 = vadd.f32 %v523, %v539
  %v556 = vadd.f32 %v524, %v540
  %v557 = vadd.f32 %v525, %v541
  %v558 = vadd.f32 %v526, %v542
  %v559 = vadd.f32 %v527, %v543
  %v560 = vadd.f32 %v528, %v544
  %v561 = vadd.f32 %v529, %v545
  %v562 = vadd.f32 %v530, %v546
  %v563 = vadd.f32 %v531, %v547
  %v564 = vadd.f32 %v532, %v548
  %v565 = vadd.f32 %v533, %v549
  %v566 = vadd.f32 %v534, %v550
  %v567 = vadd.f32 %v535, %v551
  %v568 = vadd.f32 %v536, %v552
  %v569 = vadd.f32 %v537, %v553
  %v570 = vmul.f32 %v554, -0.5
  %v571 = vmul.f32 %v555, -0.5
  %v572 = vmul.f32 %v556, -0.5
  %v573 = vmul.f32 %v557, -0.5
  %v574 = vmul.f32 %v558, -0.5
  %v575 = vmul.f32 %v559, -0.5
  %v576 = vmul.f32 %v560, -0.5
  %v577 = vmul.f32 %v561, -0.5
  %v578 = vmul.f32 %v562, -0.5
  %v579 = vmul.f32 %v563, -0.5
  %v580 = vmul.f32 %v564, -0.5
  %v581 = vmul.f32 %v565, -0.5
  %v582 = vmul.f32 %v566, -0.5
  %v583 = vmul.f32 %v567, -0.5
  %v584 = vmul.f32 %v568, -0.5
  %v585 = vmul.f32 %v569, -0.5
  %v586 = vmul.f32 %v570, 1.442695
  %v587 = vpow.pop %v586
  %v588 = vmul.f32 %v571, 1.442695
  %v589 = vpow.pop %v588
  %v590 = vmul.f32 %v572, 1.442695
  %v591 = vpow.pop %v590
  %v592 = vmul.f32 %v573, 1.442695
  %v593 = vpow.pop %v592
  %v594 = vmul.f32 %v574, 1.442695
  %v595 = vpow.pop %v594
  %v596 = vmul.f32 %v575, 1.442695
  %v597 = vpow.pop %v596
  %v598 = vmul.f32 %v576, 1.442695
  %v599 = vpow.pop %v598
  %v600 = vmul.f32 %v577, 1.442695
  %v601 = vpow.pop %v600
  %v602 = vmul.f32 %v578, 1.442695
  %v603 = vpow.pop %v602
  %v604 = vmul.f32 %v579, 1.442695
  %v605 = vpow.pop %v604
  %v606 = vmul.f32 %v580, 1.442695
  %v607 = vpow.pop %v606
  %v608 = vmul.f32 %v581, 1.442695
  %v609 = vpow.pop %v608
  %v610 = vmul.f32 %v582, 1.442695
  %v611 = vpow.pop %v610
  %v612 = vmul.f32 %v583, 1.442695
  %v613 = vpow.pop %v612
  %v614 = vmul.f32 %v584, 1.442695
  %v615 = vpow.pop %v614
  %v616 = vmul.f32 %v585, 1.442695
  %v617 = vpow.pop %v616
  %v618 = vlaneseq
  %v619 = vshrl.u32 %v618, 7
  %v620 = vsub.s32 5, %v619
  %v621 = vrot.slane %v261, %v620
  %v622 = vmul.f32 %v621, %v587
  %v623 = vmul.f32 %v621, %v589
  %v624 = vmul.f32 %v621, %v591
  %v625 = vmul.f32 %v621, %v593
  %v626 = vmul.f32 %v621, %v595
  %v627 = vmul.f32 %v621, %v597
  %v628 = vmul.f32 %v621, %v599
  %v629 = vmul.f32 %v621, %v601
  %v630 = vmul.f32 %v621, %v603
  %v631 = vmul.f32 %v621, %v605
  %v632 = vmul.f32 %v621, %v607
  %v633 = vmul.f32 %v621, %v609
  %v634 = vmul.f32 %v621, %v611
  %v635 = vmul.f32 %v621, %v613
  %v636 = vmul.f32 %v621, %v615
  %v637 = vmul.f32 %v621, %v617
  %vm638 = vcmask 261120
  %v639 = vsel %vm638, %v622, 0.0
  %640 = vadd.xlane.f32.xlu0 %v639
  %v641 = vpop.xlane.xlu0 %640
  %v642 = vsel %vm638, %v623, 0.0
  %643 = vadd.xlane.f32.xlu0 %v642
  %v644 = vpop.xlane.xlu0 %643
  %v645 = vsel %vm638, %v624, 0.0
  %646 = vadd.xlane.f32.xlu0 %v645
  %v647 = vpop.xlane.xlu0 %646
  %v648 = vsel %vm638, %v625, 0.0
  %649 = vadd.xlane.f32.xlu0 %v648
  %v650 = vpop.xlane.xlu0 %649
  %v651 = vsel %vm638, %v626, 0.0
  %652 = vadd.xlane.f32.xlu0 %v651
  %v653 = vpop.xlane.xlu0 %652
  %v654 = vsel %vm638, %v627, 0.0
  %655 = vadd.xlane.f32.xlu0 %v654
  %v656 = vpop.xlane.xlu0 %655
  %v657 = vsel %vm638, %v628, 0.0
  %658 = vadd.xlane.f32.xlu0 %v657
  %v659 = vpop.xlane.xlu0 %658
  %v660 = vsel %vm638, %v629, 0.0
  %661 = vadd.xlane.f32.xlu0 %v660
  %v662 = vpop.xlane.xlu0 %661
  %v663 = vsel %vm638, %v630, 0.0
  %664 = vadd.xlane.f32.xlu0 %v663
  %v665 = vpop.xlane.xlu0 %664
  %v666 = vsel %vm638, %v631, 0.0
  %667 = vadd.xlane.f32.xlu0 %v666
  %v668 = vpop.xlane.xlu0 %667
  %v669 = vsel %vm638, %v632, 0.0
  %670 = vadd.xlane.f32.xlu0 %v669
  %v671 = vpop.xlane.xlu0 %670
  %v672 = vsel %vm638, %v633, 0.0
  %673 = vadd.xlane.f32.xlu0 %v672
  %v674 = vpop.xlane.xlu0 %673
  %v675 = vsel %vm638, %v634, 0.0
  %676 = vadd.xlane.f32.xlu0 %v675
  %v677 = vpop.xlane.xlu0 %676
  %v678 = vsel %vm638, %v635, 0.0
  %679 = vadd.xlane.f32.xlu0 %v678
  %v680 = vpop.xlane.xlu0 %679
  %v681 = vsel %vm638, %v636, 0.0
  %682 = vadd.xlane.f32.xlu0 %v681
  %v683 = vpop.xlane.xlu0 %682
  %v684 = vsel %vm638, %v637, 0.0
  %685 = vadd.xlane.f32.xlu0 %v684
  %v686 = vpop.xlane.xlu0 %685
  %vm687 = vcmask 7168
  %688 = vst.msk [vmem:[%s5] sm:$0xff] %vm687, %v641
  %689 = vst.msk [vmem:[%s5 + $0x8] sm:$0xff] %vm687, %v644
  %690 = vst.msk [vmem:[%s5 + $0x10] sm:$0xff] %vm687, %v647
  %691 = vst.msk [vmem:[%s5 + $0x18] sm:$0xff] %vm687, %v650
  %692 = vst.msk [vmem:[%s5 + $0x20] sm:$0xff] %vm687, %v653
  %693 = vst.msk [vmem:[%s5 + $0x28] sm:$0xff] %vm687, %v656
  %694 = vst.msk [vmem:[%s5 + $0x30] sm:$0xff] %vm687, %v659
  %695 = vst.msk [vmem:[%s5 + $0x38] sm:$0xff] %vm687, %v662
  %696 = vst.msk [vmem:[%s5 + $0x40] sm:$0xff] %vm687, %v665
  %697 = vst.msk [vmem:[%s5 + $0x48] sm:$0xff] %vm687, %v668
  %698 = vst.msk [vmem:[%s5 + $0x50] sm:$0xff] %vm687, %v671
  %699 = vst.msk [vmem:[%s5 + $0x58] sm:$0xff] %vm687, %v674
  %700 = vst.msk [vmem:[%s5 + $0x60] sm:$0xff] %vm687, %v677
  %701 = vst.msk [vmem:[%s5 + $0x68] sm:$0xff] %vm687, %v680
  %702 = vst.msk [vmem:[%s5 + $0x70] sm:$0xff] %vm687, %v683
  %703 = vst.msk [vmem:[%s5 + $0x78] sm:$0xff] %vm687, %v686
  // Predicated region
  $region18: #{tpu_custom_call.1} parent=0 // pred_check
    _
  $region19: #{tpu_custom_call.1} parent=0 // pred_check_branch
    %705 = sbr.rel (0) target = $region21
  $region20: #{tpu_custom_call.1} parent=0 // pred_region
    _
  $region21: #{tpu_custom_call.1} parent=0 // pred_fallthru
    _
  // Predicated region
  $region22: #{tpu_custom_call.1} parent=0 // pred_check
    _
  $region23: #{tpu_custom_call.1} parent=0 // pred_check_branch
    %707 = sbr.rel (0) target = $region25
  $region24: #{tpu_custom_call.1} parent=0 // pred_region
    _
  $region25: #{tpu_custom_call.1} parent=0 // pred_fallthru
    _
  // Predicated region
  $region26: #{tpu_custom_call.1} parent=0 // pred_check
    _
  $region27: #{tpu_custom_call.1} parent=0 // pred_check_branch
    %709 = sbr.rel (0) target = $region29
  $region28: #{tpu_custom_call.1} parent=0 // pred_region
    _
  $region29: #{tpu_custom_call.1} parent=0 // pred_fallthru
    _
  // Predicated region
  $region30: #{tpu_custom_call.1} parent=0 // pred_check
    _
  $region31: #{tpu_custom_call.1} parent=0 // pred_check_branch
    %711 = sbr.rel (0) target = $region33
  $region32: #{tpu_custom_call.1} parent=0 // pred_region
    _
  $region33: #{tpu_custom_call.1} parent=0 // pred_fallthru
    _

</llo_original>
